<compile_context>
chip_gen: v5e
topology: v5e:2x2
jax: 0.10.0
libtpu: 0.0.40
codegen_flags: <defaults>
</compile_context>

<pallas_src>
import functools

import jax
import jax.numpy as jnp
from jax.experimental import pallas as pl
from jax.experimental.pallas import tpu as pltpu


def _ddsarsa_mlp_kernel(x_ref, w1_ref, w2_ref, w3_ref, o_ref):
    # x_ref : (initus, tB) bf16 -- batch on lanes (lane-dense).
    # w*_ref: (n_nets, out, in) bf16, constant across the grid (VMEM-resident).
    # o_ref : (n_nets, exitus, tB) f32.
    x = x_ref[...]                      # loaded once; reused by every stacked net
    n_nets = w1_ref.shape[0]
    for n in range(n_nets):             # static unroll (n_nets is 1 or 2)
        h1 = jnp.maximum(
            jnp.dot(w1_ref[n], x, preferred_element_type=jnp.float32), 0.0)
        h2 = jnp.maximum(
            jnp.dot(w2_ref[n], h1.astype(jnp.bfloat16),
                    preferred_element_type=jnp.float32), 0.0)
        q = jnp.dot(w3_ref[n], h2.astype(jnp.bfloat16),
                    preferred_element_type=jnp.float32)
        o_ref[n] = q.astype(o_ref.dtype)


def _round_up(a, m):
    return ((a + m - 1) // m) * m


def _pick_batch_tile(B, block_b):
    """Lane-aligned batch tile (multiple of 128, <= B)."""
    if B < 128:
        return B                        # full-dim block (tiny-batch edge case)
    max_tile = min(block_b, (B // 128) * 128)
    n_steps = pl.cdiv(B, max_tile)
    if B >= 1024:
        # keep >= 2 roughly-equal steps so both v7x TensorCores get work
        n_steps = max(n_steps, 2)
    return min(max_tile, _round_up(pl.cdiv(B, n_steps), 128))


def _stacked_forward(x_t, w1_s, w2_s, w3_s, *, block_b):
    """x_t: (initus, B); w*_s: (n_nets, out, in).  Returns (n_nets, exitus, B) f32."""
    initus, B = x_t.shape
    n_nets = w1_s.shape[0]
    exitus = w3_s.shape[1]

    # bf16 operands, f32 accumulation inside the kernel.
    x_t = x_t.astype(jnp.bfloat16)
    w1_s = w1_s.astype(jnp.bfloat16)
    w2_s = w2_s.astype(jnp.bfloat16)
    w3_s = w3_s.astype(jnp.bfloat16)

    tB = _pick_batch_tile(B, block_b)

    return pl.pallas_call(
        _ddsarsa_mlp_kernel,
        out_shape=jax.ShapeDtypeStruct((n_nets, exitus, B), jnp.float32),
        grid=(pl.cdiv(B, tB),),
        in_specs=[
            # activations: walk the batch (lane) axis; last block may be ragged
            pl.BlockSpec((initus, tB), lambda i: (0, i)),
            # weights: constant block index -> DMA'd once, VMEM-resident for all steps
            pl.BlockSpec(w1_s.shape, lambda i: (0, 0, 0)),
            pl.BlockSpec(w2_s.shape, lambda i: (0, 0, 0)),
            pl.BlockSpec(w3_s.shape, lambda i: (0, 0, 0)),
        ],
        out_specs=pl.BlockSpec((n_nets, exitus, tB), lambda i: (0, 0, i)),
        compiler_params=pltpu.CompilerParams(
            dimension_semantics=("parallel",)),
    )(x_t, w1_s, w2_s, w3_s)


@functools.partial(jax.jit, static_argnames=("block_b",))
def deep_double_sarsa_forward(x, w1, w2, w3, *, block_b=4096):
    """Single Q-network forward == DeepDoubleSarsa.forward.

    x: (B, initus); w1: (64, initus), w2: (64, 64), w3: (exitus, 64) in PyTorch
    (out, in) layout, bias=False.  Returns (B, exitus) float32.
    """
    q = _stacked_forward(x.T, w1[None], w2[None], w3[None], block_b=block_b)
    return q[0].T


@functools.partial(jax.jit, static_argnames=("block_b",))
def deep_double_sarsa_forward_pair(x, wa, wb, *, block_b=4096):
    """Both Double-SARSA Q-networks on the same states in one fused kernel call.

    wa, wb: (w1, w2, w3) tuples in PyTorch (out, in) layout.
    Returns (qa, qb), each (B, exitus) float32.
    """
    w1 = jnp.stack([wa[0], wb[0]])
    w2 = jnp.stack([wa[1], wb[1]])
    w3 = jnp.stack([wa[2], wb[2]])
    q = _stacked_forward(x.T, w1, w2, w3, block_b=block_b)
    return q[0].T, q[1].T


def _init_linear_weight(key, out_features, in_features):
    # torch.nn.Linear default init: U(-1/sqrt(in), 1/sqrt(in)), stored as (out, in).
    bound = 1.0 / jnp.sqrt(jnp.asarray(in_features, jnp.float32))
    return jax.random.uniform(key, (out_features, in_features), jnp.float32,
                              minval=-bound, maxval=bound)


if __name__ == "__main__":
    key = jax.random.PRNGKey(0)
    k_x, ka1, ka2, ka3, kb1, kb2, kb3 = jax.random.split(key, 7)

    batch = 200    # not a multiple of 128 -> exercises the ragged last grid block
    initus = 32    # input feature size
    exitus = 8     # number of actions
    hidden = 64    # fixed by the module

    x = jax.random.normal(k_x, (batch, initus), jnp.float32)

    # Two Q-networks (Double SARSA), PyTorch-shaped (out, in) weights.
    wa = (_init_linear_weight(ka1, hidden, initus),
          _init_linear_weight(ka2, hidden, hidden),
          _init_linear_weight(ka3, exitus, hidden))
    wb = (_init_linear_weight(kb1, hidden, initus),
          _init_linear_weight(kb2, hidden, hidden),
          _init_linear_weight(kb3, exitus, hidden))

    def ref_forward(x, w):
        h = jnp.maximum(x @ w[0].T, 0.0)
        h = jnp.maximum(h @ w[1].T, 0.0)
        return h @ w[2].T

    # Single-network forward (module semantics); block_b=128 -> 2-step pipelined grid.
    qa = deep_double_sarsa_forward(x, *wa, block_b=128)
    qa = jax.block_until_ready(qa)
    assert qa.shape == (batch, exitus)
    assert jnp.allclose(qa, ref_forward(x, wa), atol=2e-2, rtol=2e-2), "single-net mismatch"

    # Fused two-network forward: x read from HBM once, both Q-nets in one pallas_call.
    q1, q2 = deep_double_sarsa_forward_pair(x, wa, wb)
    q1, q2 = jax.block_until_ready((q1, q2))
    assert q1.shape == (batch, exitus) and q2.shape == (batch, exitus)
    assert jnp.allclose(q1, ref_forward(x, wa), atol=2e-2, rtol=2e-2), "pair net-A mismatch"
    assert jnp.allclose(q2, ref_forward(x, wb), atol=2e-2, rtol=2e-2), "pair net-B mismatch"

    # TODO(synk): update()/perturb()/save()/load() (RMSprop step, PBT noise, checkpoint IO)
    # are host/training-side utilities, not part of the forward pass; not implemented here.
    print("KERNEL_OK")
</pallas_src>

<mosaic_0001>
module attributes {stable_mosaic.version = 11 : i64} {
  func.func @_ddsarsa_mlp_kernel(%arg0: i32, %arg1: memref<32x128xbf16, #tpu.memory_space<vmem>>, %arg2: memref<1x64x32xbf16, #tpu.memory_space<vmem>>, %arg3: memref<1x64x64xbf16, #tpu.memory_space<vmem>>, %arg4: memref<1x8x64xbf16, #tpu.memory_space<vmem>>, %arg5: memref<1x8x128xf32, #tpu.memory_space<vmem>>) attributes {dimension_semantics = [#tpu.dimension_semantics<parallel>], iteration_bounds = array<i64: 2>, scalar_prefetch = 0 : i64, scratch_operands = 0 : i64, tpu.core_type = #tpu.core_type<tc>, window_params = [{transform_indices = @transform_0, window_bounds = array<i64: 32, 128>}, {pipeline_mode = #tpu.pipeline_mode<synchronous>, transform_indices = @transform_1, window_bounds = array<i64: 1, 64, 32>}, {pipeline_mode = #tpu.pipeline_mode<synchronous>, transform_indices = @transform_2, window_bounds = array<i64: 1, 64, 64>}, {pipeline_mode = #tpu.pipeline_mode<synchronous>, transform_indices = @transform_3, window_bounds = array<i64: 1, 8, 64>}, {transform_indices = @transform_4, window_bounds = array<i64: 1, 8, 128>}]} {
    %c0 = arith.constant 0 : index
    %c0_0 = arith.constant 0 : index
    %0 = vector.load %arg1[%c0, %c0_0] : memref<32x128xbf16, #tpu.memory_space<vmem>>, vector<32x128xbf16>
    %c0_1 = arith.constant 0 : index
    %c0_2 = arith.constant 0 : index
    %c0_3 = arith.constant 0 : index
    %1 = vector.load %arg2[%c0_1, %c0_2, %c0_3] : memref<1x64x32xbf16, #tpu.memory_space<vmem>>, vector<1x64x32xbf16>
    %2 = vector.shape_cast %1 : vector<1x64x32xbf16> to vector<64x32xbf16>
    %cst = arith.constant dense<0.000000e+00> : vector<64x128xf32>
    %3 = tpu.matmul %2, %0, %cst {dimension_numbers = #tpu.dot_dimension_numbers<[1], [0], [0], [1], [0, 0, 1, 1], [], []>} : vector<64x32xbf16>, vector<32x128xbf16>, vector<64x128xf32> -> vector<64x128xf32>
    %cst_4 = arith.constant 0.000000e+00 : f32
    %4 = vector.broadcast %cst_4 : f32 to vector<64x128xf32>
    %5 = arith.maximumf %3, %4 : vector<64x128xf32>
    %c0_5 = arith.constant 0 : index
    %c0_6 = arith.constant 0 : index
    %c0_7 = arith.constant 0 : index
    %6 = vector.load %arg3[%c0_5, %c0_6, %c0_7] : memref<1x64x64xbf16, #tpu.memory_space<vmem>>, vector<1x64x64xbf16>
    %7 = vector.shape_cast %6 : vector<1x64x64xbf16> to vector<64x64xbf16>
    %8 = arith.truncf %5 : vector<64x128xf32> to vector<64x128xbf16>
    %cst_8 = arith.constant dense<0.000000e+00> : vector<64x128xf32>
    %9 = tpu.matmul %7, %8, %cst_8 {dimension_numbers = #tpu.dot_dimension_numbers<[1], [0], [0], [1], [0, 0, 1, 1], [], []>} : vector<64x64xbf16>, vector<64x128xbf16>, vector<64x128xf32> -> vector<64x128xf32>
    %cst_9 = arith.constant 0.000000e+00 : f32
    %10 = vector.broadcast %cst_9 : f32 to vector<64x128xf32>
    %11 = arith.maximumf %9, %10 : vector<64x128xf32>
    %c0_10 = arith.constant 0 : index
    %c0_11 = arith.constant 0 : index
    %c0_12 = arith.constant 0 : index
    %12 = vector.load %arg4[%c0_10, %c0_11, %c0_12] : memref<1x8x64xbf16, #tpu.memory_space<vmem>>, vector<1x8x64xbf16>
    %13 = vector.shape_cast %12 : vector<1x8x64xbf16> to vector<8x64xbf16>
    %14 = arith.truncf %11 : vector<64x128xf32> to vector<64x128xbf16>
    %cst_13 = arith.constant dense<0.000000e+00> : vector<8x128xf32>
    %15 = tpu.matmul %13, %14, %cst_13 {dimension_numbers = #tpu.dot_dimension_numbers<[1], [0], [0], [1], [0, 0, 1, 1], [], []>} : vector<8x64xbf16>, vector<64x128xbf16>, vector<8x128xf32> -> vector<8x128xf32>
    %c0_14 = arith.constant 0 : index
    %c0_15 = arith.constant 0 : index
    %c0_16 = arith.constant 0 : index
    %16 = vector.load %arg5[%c0_14, %c0_15, %c0_16] : memref<1x8x128xf32, #tpu.memory_space<vmem>>, vector<1x8x128xf32>
    %17 = vector.shape_cast %16 : vector<1x8x128xf32> to vector<8x128xf32>
    %18 = vector.shape_cast %15 : vector<8x128xf32> to vector<1x8x128xf32>
    tpu.vector_store %arg5[%c0_14, %c0_15, %c0_16], %18 {strides = array<i32>} : memref<1x8x128xf32, #tpu.memory_space<vmem>>, vector<1x8x128xf32>,
    return
  }
  func.func @transform_0(%arg0: i32) -> (i32, i32) {
    %c0_i32 = arith.constant 0 : i32
    %c0_i32_0 = arith.constant 0 : i32
    return %c0_i32, %arg0 : i32, i32
  }
  func.func @transform_1(%arg0: i32) -> (i32, i32, i32) {
    %c0_i32 = arith.constant 0 : i32
    %c0_i32_0 = arith.constant 0 : i32
    %c0_i32_1 = arith.constant 0 : i32
    %c0_i32_2 = arith.constant 0 : i32
    return %c0_i32, %c0_i32_0, %c0_i32_1 : i32, i32, i32
  }
  func.func @transform_2(%arg0: i32) -> (i32, i32, i32) {
    %c0_i32 = arith.constant 0 : i32
    %c0_i32_0 = arith.constant 0 : i32
    %c0_i32_1 = arith.constant 0 : i32
    %c0_i32_2 = arith.constant 0 : i32
    return %c0_i32, %c0_i32_0, %c0_i32_1 : i32, i32, i32
  }
  func.func @transform_3(%arg0: i32) -> (i32, i32, i32) {
    %c0_i32 = arith.constant 0 : i32
    %c0_i32_0 = arith.constant 0 : i32
    %c0_i32_1 = arith.constant 0 : i32
    %c0_i32_2 = arith.constant 0 : i32
    return %c0_i32, %c0_i32_0, %c0_i32_1 : i32, i32, i32
  }
  func.func @transform_4(%arg0: i32) -> (i32, i32, i32) {
    %c0_i32 = arith.constant 0 : i32
    %c0_i32_0 = arith.constant 0 : i32
    %c0_i32_1 = arith.constant 0 : i32
    return %c0_i32, %c0_i32_0, %arg0 : i32, i32, i32
  }
}

</mosaic_0001>

<llo_original>
// kernel: deep_double_sarsa_forward.1
$region0: #{deep_double_sarsa_forward.1}
  #allocation0 [shape = 'u32[]', space=smem, size = 0x4, offset = 0x4, fixed_abs, tag = 'smem constant byte address 0x4 - core index']
  #allocation1 [shape = 'u32[72,128]{1,0:T(1,128)}', space=vmem, size = 0x9000, scoped, tag = 'internal scratch']
  %s0 = inlined_call_operand.vmem [shape: bf16[32,200], index: 0, kind: input, shape index: {}]
  %s1 = inlined_call_operand.vmem [shape: bf16[1,64,32], index: 1, kind: input, shape index: {}]
  %s2 = inlined_call_operand.vmem [shape: bf16[1,64,64], index: 2, kind: input, shape index: {}]
  %s3 = inlined_call_operand.vmem [shape: bf16[1,8,64], index: 3, kind: input, shape index: {}]
  %s4 = inlined_call_operand.hbm [shape: f32[1,8,200], index: 4, kind: output, shape index: {}]
  %s5 = sld [smem:[#allocation0]]
  $region90: #{deep_double_sarsa_forward.1} parent=0
    _
  %s7 = ssub.s32 1, %s5
  %s8 = scalar_select 0, %s7, %s5
  $region1: #{deep_double_sarsa_forward.1} parent=0
    #allocation2 [shape = 'u8[16384]{0}', space=vmem, size = 0x4000, scoped, tag = 'input window, operand 0']
    #allocation3 [shape = 'u8[8192]{0}', space=vmem, size = 0x2000, scoped, tag = 'output window, operand 0']
    #allocation4 [shape = 's32[2]{0}', space=sflag, size = 0x8, scoped, tag = 'scoped memory for deep_double_sarsa_forward.1']
    %9 = vsyncpa [#allocation4], 0
    %s10 = scalar_lea.sflag [#allocation4], 1
    %11 = vsyncpa %s10, 0
    loop: start=0, step=1, limit=4
    $region2: #{deep_double_sarsa_forward.1} parent=1 // loop_pre_header
      _
    $region3: #{deep_double_sarsa_forward.1} parent=1 // loop_header
      %s13 = sphi 0, %s17
      %p14 = scmp.ge.s32.totalorder %s13, 4
      %s23 = sphi 0, %s25
      %s26 = sphi 0, %s23
      %s27 = sphi 0, %s26
      %s43 = sphi 0, %s27
      %s47 = sphi 0, %s47
      %s49 = sphi 0, %s47
      %s50 = sphi 0, %s49
      %s64 = sphi 0, %s50
      %s68 = sphi 0, %s68
      %s70 = sphi 0, %s68
      %s71 = sphi 0, %s70
      %s85 = sphi 0, %s71
      %s89 = sphi 0, %s89
      %s91 = sphi 0, %s89
      %s92 = sphi 0, %s91
      %s106 = sphi 0, %s92
      %s112 = sphi 0, %s114
      %s115 = sphi 0, %s112
      %s116 = sphi 0, %s115
      %s132 = sphi 0, %s116
    $region4: #{deep_double_sarsa_forward.1} parent=1 // loop_header_branch
      %16 = sbr.rel (%p14) target = $region8
    $region5: #{deep_double_sarsa_forward.1} parent=1 // loop_body
      %s18 = ssub.s32 %s13, 1
      %s19 = ssub.s32 %s13, 2
      %s20 = sadd.s32 %s13, 1
      %s21 = ssub.s32 %s13, %s20
      %p22 = scmp.eq.s32.totalorder %s21, 0
      %s24 = sadd.s32 %s23, 1
      %s25 = scalar_select %p22, %s23, %s24
      %p28 = pneg %p22
      %p29 = scmp.eq.s32.totalorder %s13, 1
      %p30 = por %p28, %p29
      %p31 = scmp.ne.s32.totalorder %s23, %s26
      %p32 = scmp.eq.s32.totalorder %s13, 0
      %p33 = por %p31, %p32
      %p34 = scmp.ne.s32.totalorder %s23, %s26
      %p35 = scmp.eq.s32.totalorder %s18, 1
      %p36 = por %p34, %p35
      %p37 = scmp.ne.s32.totalorder %s26, %s27
      %p38 = scmp.eq.s32.totalorder %s18, 0
      %p39 = por %p37, %p38
      %p40 = scmp.ne.s32.totalorder %s26, %s27
      %p41 = scmp.eq.s32.totalorder %s19, 1
      %p42 = por %p40, %p41
      %p44 = scmp.ne.s32.totalorder %s27, %s43
      %p45 = scmp.eq.s32.totalorder %s19, 0
      %p46 = por %p44, %p45
      %s48 = sadd.s32 %s47, 1
      %p51 = scmp.eq.s32.totalorder %s13, 1
      %p52 = scmp.ne.s32.totalorder %s47, %s49
      %p53 = scmp.eq.s32.totalorder %s13, 0
      %p54 = por %p52, %p53
      %p55 = scmp.ne.s32.totalorder %s47, %s49
      %p56 = scmp.eq.s32.totalorder %s18, 1
      %p57 = por %p55, %p56
      %p58 = scmp.ne.s32.totalorder %s49, %s50
      %p59 = scmp.eq.s32.totalorder %s18, 0
      %p60 = por %p58, %p59
      %p61 = scmp.ne.s32.totalorder %s49, %s50
      %p62 = scmp.eq.s32.totalorder %s19, 1
      %p63 = por %p61, %p62
      %p65 = scmp.ne.s32.totalorder %s50, %s64
      %p66 = scmp.eq.s32.totalorder %s19, 0
      %p67 = por %p65, %p66
      %s69 = sadd.s32 %s68, 1
      %p72 = scmp.eq.s32.totalorder %s13, 1
      %p73 = scmp.ne.s32.totalorder %s68, %s70
      %p74 = scmp.eq.s32.totalorder %s13, 0
      %p75 = por %p73, %p74
      %p76 = scmp.ne.s32.totalorder %s68, %s70
      %p77 = scmp.eq.s32.totalorder %s18, 1
      %p78 = por %p76, %p77
      %p79 = scmp.ne.s32.totalorder %s70, %s71
      %p80 = scmp.eq.s32.totalorder %s18, 0
      %p81 = por %p79, %p80
      %p82 = scmp.ne.s32.totalorder %s70, %s71
      %p83 = scmp.eq.s32.totalorder %s19, 1
      %p84 = por %p82, %p83
      %p86 = scmp.ne.s32.totalorder %s71, %s85
      %p87 = scmp.eq.s32.totalorder %s19, 0
      %p88 = por %p86, %p87
      %s90 = sadd.s32 %s89, 1
      %p93 = scmp.eq.s32.totalorder %s13, 1
      %p94 = scmp.ne.s32.totalorder %s89, %s91
      %p95 = scmp.eq.s32.totalorder %s13, 0
      %p96 = por %p94, %p95
      %p97 = scmp.ne.s32.totalorder %s89, %s91
      %p98 = scmp.eq.s32.totalorder %s18, 1
      %p99 = por %p97, %p98
      %p100 = scmp.ne.s32.totalorder %s91, %s92
      %p101 = scmp.eq.s32.totalorder %s18, 0
      %p102 = por %p100, %p101
      %p103 = scmp.ne.s32.totalorder %s91, %s92
      %p104 = scmp.eq.s32.totalorder %s19, 1
      %p105 = por %p103, %p104
      %p107 = scmp.ne.s32.totalorder %s92, %s106
      %p108 = scmp.eq.s32.totalorder %s19, 0
      %p109 = por %p107, %p108
      %s110 = ssub.s32 %s13, %s20
      %p111 = scmp.eq.s32.totalorder %s110, 0
      %s113 = sadd.s32 %s112, 1
      %s114 = scalar_select %p111, %s112, %s113
      %p117 = pneg %p111
      %p118 = scmp.eq.s32.totalorder %s13, 1
      %p119 = por %p117, %p118
      %p120 = scmp.ne.s32.totalorder %s112, %s115
      %p121 = scmp.eq.s32.totalorder %s13, 0
      %p122 = por %p120, %p121
      %p123 = scmp.ne.s32.totalorder %s112, %s115
      %p124 = scmp.eq.s32.totalorder %s18, 1
      %p125 = por %p123, %p124
      %p126 = scmp.ne.s32.totalorder %s115, %s116
      %p127 = scmp.eq.s32.totalorder %s18, 0
      %p128 = por %p126, %p127
      %p129 = scmp.ne.s32.totalorder %s115, %s116
      %p130 = scmp.eq.s32.totalorder %s19, 1
      %p131 = por %p129, %p130
      %p133 = scmp.ne.s32.totalorder %s116, %s132
      %p134 = scmp.eq.s32.totalorder %s19, 0
      %p135 = por %p133, %p134
      %p136 = scmp.le.s32.totalorder 1, %s13
      %p137 = scmp.lt.s32.totalorder %s13, 3
      %p138 = pnand %p136, %p137
      %p139 = pneg %p138
      // Predicated region
      $region9: #{deep_double_sarsa_forward.1} parent=5 // pred_check
        _
      $region10: #{deep_double_sarsa_forward.1} parent=5 // pred_check_branch
        %141 = sbr.rel (%p138) target = $region12
      $region11: #{deep_double_sarsa_forward.1} parent=5 // pred_region
        %s142 = ssub.s32 %s13, 1
        // Predicated region
        $region13: #{deep_double_sarsa_forward.1} parent=11 // pred_check
          %p143 = pneg %p60
        $region14: #{deep_double_sarsa_forward.1} parent=11 // pred_check_branch
          %145 = sbr.rel (%p143) target = $region16
        $region15: #{deep_double_sarsa_forward.1} parent=11 // pred_region
          _
        $region16: #{deep_double_sarsa_forward.1} parent=11 // pred_fallthru
          _
        // Predicated region
        $region17: #{deep_double_sarsa_forward.1} parent=11 // pred_check
          %p146 = pneg %p81
        $region18: #{deep_double_sarsa_forward.1} parent=11 // pred_check_branch
          %148 = sbr.rel (%p146) target = $region20
        $region19: #{deep_double_sarsa_forward.1} parent=11 // pred_region
          _
        $region20: #{deep_double_sarsa_forward.1} parent=11 // pred_fallthru
          _
        // Predicated region
        $region21: #{deep_double_sarsa_forward.1} parent=11 // pred_check
          %p149 = pneg %p102
        $region22: #{deep_double_sarsa_forward.1} parent=11 // pred_check_branch
          %151 = sbr.rel (%p149) target = $region24
        $region23: #{deep_double_sarsa_forward.1} parent=11 // pred_region
          _
        $region24: #{deep_double_sarsa_forward.1} parent=11 // pred_fallthru
          _
      $region12: #{deep_double_sarsa_forward.1} parent=5 // pred_fallthru
        _
      %p152 = scmp.lt.s32.totalorder %s13, 2
      // Predicated region
      $region25: #{deep_double_sarsa_forward.1} parent=5 // pred_check
        %p153 = pneg %p152
      $region26: #{deep_double_sarsa_forward.1} parent=5 // pred_check_branch
        %155 = sbr.rel (%p153) target = $region28
      $region27: #{deep_double_sarsa_forward.1} parent=5 // pred_region
        // Predicated region
        $region29: #{deep_double_sarsa_forward.1} parent=27 // pred_check
          %p156 = pneg %p33
        $region30: #{deep_double_sarsa_forward.1} parent=27 // pred_check_branch
          %158 = sbr.rel (%p156) target = $region32
        $region31: #{deep_double_sarsa_forward.1} parent=27 // pred_region
          %s159 = sand.u32 %s23, 1
          %s160 = sand.u32 %s23, 1
          %s161 = smul.addr %s160, 16
          %s162 = scalar_lea.vmem [#allocation2], %s161
          %s163 = smul.addr %s13, 4
          %s164 = scalar_lea.vmem %s0, %s163
          // Predicated region
          $region33: #{deep_double_sarsa_forward.1} parent=31 // pred_check
            _
          $region34: #{deep_double_sarsa_forward.1} parent=31 // pred_check_branch
            %166 = sbr.rel (0) target = $region36
          $region35: #{deep_double_sarsa_forward.1} parent=31 // pred_region
            // Predicated region
            $region37: #{deep_double_sarsa_forward.1} parent=35 // pred_check
              _
            $region38: #{deep_double_sarsa_forward.1} parent=35 // pred_check_branch
              %168 = sbr.rel target = $region40
            $region39: #{deep_double_sarsa_forward.1} parent=35 // pred_region
              // Predicated region
              $region52: #{deep_double_sarsa_forward.1} parent=39 // pred_check
                _
              $region53: #{deep_double_sarsa_forward.1} parent=39 // pred_check_branch
                %190 = sbr.rel (0) target = $region55
              $region54: #{deep_double_sarsa_forward.1} parent=39 // pred_region
                loop: start=0, step=1, limit=1
                $region56: #{deep_double_sarsa_forward.1} parent=54 // loop_pre_header
                  _
                $region57: #{deep_double_sarsa_forward.1} parent=54 // loop_header
                  %s192 = sphi 0, %s196
                  %p193 = scmp.ge.s32.totalorder %s192, 1
                  %s197 = sphi %s164, %s164
                  %s198 = sphi %s162, %s162
                $region58: #{deep_double_sarsa_forward.1} parent=54 // loop_header_branch
                  %195 = sbr.rel (%p193) target = $region62
                $region59: #{deep_double_sarsa_forward.1} parent=54 // loop_body
                  _
                $region60: #{deep_double_sarsa_forward.1} parent=54 // loop_footer
                  %s196 = sadd.s32 1, %s192
                $region61: #{deep_double_sarsa_forward.1} parent=54 // loop_footer_branch
                  %191 = sbr.rel target = $region57
                $region62: #{deep_double_sarsa_forward.1} parent=54 // loop_exit
                  _
                %s200 = ssub.s32 16, 1
                loop: start=0, step=1, limit=1
                $region63: #{deep_double_sarsa_forward.1} parent=54 // loop_pre_header
                  _
                $region64: #{deep_double_sarsa_forward.1} parent=54 // loop_header
                  %s202 = sphi 0, %s206
                  %p203 = scmp.ge.s32.totalorder %s202, 1
                  %s207 = sphi %s164, %s164
                  %s208 = sphi %s162, %s162
                $region65: #{deep_double_sarsa_forward.1} parent=54 // loop_header_branch
                  %205 = sbr.rel (%p203) target = $region69
                $region66: #{deep_double_sarsa_forward.1} parent=54 // loop_body
                  %v209 = vld [vmem:[%s207] sm:%s200]
                  %210 = vst [vmem:[%s208] sm:%s200] %v209
                  %v211 = vld [vmem:[%s207 + $0x8] sm:%s200]
                  %212 = vst [vmem:[%s208 + $0x4] sm:%s200] %v211
                  %v213 = vld [vmem:[%s207 + $0x10] sm:%s200]
                  %214 = vst [vmem:[%s208 + $0x8] sm:%s200] %v213
                  %v215 = vld [vmem:[%s207 + $0x18] sm:%s200]
                  %216 = vst [vmem:[%s208 + $0xc] sm:%s200] %v215
                $region67: #{deep_double_sarsa_forward.1} parent=54 // loop_footer
                  %s206 = sadd.s32 1, %s202
                $region68: #{deep_double_sarsa_forward.1} parent=54 // loop_footer_branch
                  %201 = sbr.rel target = $region64
                $region69: #{deep_double_sarsa_forward.1} parent=54 // loop_exit
                  _
              $region55: #{deep_double_sarsa_forward.1} parent=39 // pred_fallthru
                _
            $region40: #{deep_double_sarsa_forward.1} parent=35 // pred_fallthru
              _
            // Predicated region
            $region41: #{deep_double_sarsa_forward.1} parent=35 // pred_check
              _
            $region42: #{deep_double_sarsa_forward.1} parent=35 // pred_check_branch
              %170 = sbr.rel (0) target = $region44
            $region43: #{deep_double_sarsa_forward.1} parent=35 // pred_region
              %s172 = ssub.s32 16, 1
              loop: start=0, step=1, limit=1
              $region45: #{deep_double_sarsa_forward.1} parent=43 // loop_pre_header
                _
              $region46: #{deep_double_sarsa_forward.1} parent=43 // loop_header
                %s174 = sphi 0, %s178
                %p175 = scmp.ge.s32.totalorder %s174, 1
                %s179 = sphi %s164, %s164
                %s180 = sphi %s162, %s162
              $region47: #{deep_double_sarsa_forward.1} parent=43 // loop_header_branch
                %177 = sbr.rel (%p175) target = $region51
              $region48: #{deep_double_sarsa_forward.1} parent=43 // loop_body
                %v181 = vld [vmem:[%s179] sm:%s172]
                %182 = vst [vmem:[%s180] sm:%s172] %v181
                %v183 = vld [vmem:[%s179 + $0x8] sm:%s172]
                %184 = vst [vmem:[%s180 + $0x4] sm:%s172] %v183
                %v185 = vld [vmem:[%s179 + $0x10] sm:%s172]
                %186 = vst [vmem:[%s180 + $0x8] sm:%s172] %v185
                %v187 = vld [vmem:[%s179 + $0x18] sm:%s172]
                %188 = vst [vmem:[%s180 + $0xc] sm:%s172] %v187
              $region49: #{deep_double_sarsa_forward.1} parent=43 // loop_footer
                %s178 = sadd.s32 1, %s174
              $region50: #{deep_double_sarsa_forward.1} parent=43 // loop_footer_branch
                %173 = sbr.rel target = $region46
              $region51: #{deep_double_sarsa_forward.1} parent=43 // loop_exit
                _
            $region44: #{deep_double_sarsa_forward.1} parent=35 // pred_fallthru
              _
          $region36: #{deep_double_sarsa_forward.1} parent=31 // pred_fallthru
            _
          %217 = vnop
        $region32: #{deep_double_sarsa_forward.1} parent=27 // pred_fallthru
          _
      $region28: #{deep_double_sarsa_forward.1} parent=5 // pred_fallthru
        _
      %p218 = scmp.le.s32.totalorder 1, %s13
      %p219 = scmp.lt.s32.totalorder %s13, 3
      %p220 = pnand %p218, %p219
      %p221 = pneg %p220
      // Predicated region
      $region70: #{deep_double_sarsa_forward.1} parent=5 // pred_check
        _
      $region71: #{deep_double_sarsa_forward.1} parent=5 // pred_check_branch
        %223 = sbr.rel (%p220) target = $region73
      $region72: #{deep_double_sarsa_forward.1} parent=5 // pred_region
        %s224 = ssub.s32 %s13, 1
        %s225 = sand.u32 %s26, 1
        %s226 = sand.u32 %s26, 1
        %s227 = smul.addr %s226, 16
        %s228 = scalar_lea.vmem [#allocation2], %s227
        // Predicated region
        $region74: #{deep_double_sarsa_forward.1} parent=72 // pred_check
          %p229 = pneg %p39
        $region75: #{deep_double_sarsa_forward.1} parent=72 // pred_check_branch
          %231 = sbr.rel (%p229) target = $region77
        $region76: #{deep_double_sarsa_forward.1} parent=72 // pred_region
          _
        $region77: #{deep_double_sarsa_forward.1} parent=72 // pred_fallthru
          _
        %s232 = sand.u32 %s26, 1
        %s233 = sand.u32 %s26, 1
        %s234 = smul.addr %s233, 16
        %s235 = scalar_lea.vmem [#allocation2], %s234
        %p236 = pneg %p39
        %p237 = pneg %p36
        %p238 = pneg %p60
        %p239 = pneg %p57
        %p240 = pneg %p81
        %p241 = pneg %p78
        %p242 = pneg %p102
        %p243 = pneg %p99
        %p244 = pneg %p128
        %p245 = pneg %p125
        %s246 = sand.u32 %s115, 1
        %s247 = scalar_lea.sflag [#allocation4], %s246
        %s248 = sand.u32 %s115, 1
        %s249 = smul.addr %s248, 8
        %s250 = scalar_lea.vmem [#allocation3], %s249
        %v252 = vld [vmem:[%s228] sm:$0xf]
        %v253 = vld [vmem:[%s228 + $0x4] sm:$0xf]
        %v254 = vld [vmem:[%s228 + $0x8] sm:$0xf]
        %v255 = vld [vmem:[%s228 + $0xc] sm:$0xf]
        %v256 = vld [vmem:[%s1] sm:$0xf]
        %v257 = vld [vmem:[%s1 + $0x4] sm:$0xf]
        %v258 = vld [vmem:[%s1 + $0x8] sm:$0xf]
        %v259 = vld [vmem:[%s1 + $0xc] sm:$0xf]
        %v260 = vld [vmem:[%s1 + $0x10] sm:$0xf]
        %v261 = vld [vmem:[%s1 + $0x14] sm:$0xf]
        %v262 = vld [vmem:[%s1 + $0x18] sm:$0xf]
        %v263 = vld [vmem:[%s1 + $0x1c] sm:$0xf]
        %v272 = vunpack.c.l.b16 %v256
        %v273 = vunpack.c.l.b16 %v257
        %v274 = vunpack.c.l.b16 %v258
        %v275 = vunpack.c.l.b16 %v259
        %v276 = vunpack.c.l.b16 %v260
        %v277 = vunpack.c.l.b16 %v261
        %v278 = vunpack.c.l.b16 %v262
        %v279 = vunpack.c.l.b16 %v263
        %v280 = vpack.c.b16 %v273, %v272
        %v281 = vpack.c.b16 %v275, %v274
        %v282 = vpack.c.b16 %v277, %v276
        %v283 = vpack.c.b16 %v279, %v278
        %v288 = vunpack.c.l.b16 %v252
        %v289 = vunpack.c.l.b16 %v253
        %v290 = vunpack.c.l.b16 %v254
        %v291 = vunpack.c.l.b16 %v255
        %v292 = vpack.c.b16 %v289, %v288
        %v293 = vpack.c.b16 %v291, %v290
        %vm296 = vcmask 261120
        %v298 = vsel %vm296, %v280, 0
        %v301 = vsel %vm296, %v281, 0
        %v304 = vsel %vm296, %v282, 0
        %v307 = vsel %vm296, %v283, 0
        %309 = vmatpush.bf16.msra.mxu0 0
        %310 = vmatpush.bf16.msra.mxu0 0
        %311 = vmatpush.bf16.msra.mxu0 0
        %312 = vmatpush.bf16.msra.mxu0 0
        %313 = vmatpush.bf16.msra.mxu0 0
        %314 = vmatpush.bf16.msra.mxu0 0
        %315 = vmatpush.bf16.msra.mxu0 %v293
        %316 = vmatpush.bf16.msra.mxu0 %v292
        %317 = vmatmul.bf16.gmra.mxu0 %v298
        %v318 = vpop.f32.mrf.mxu0
        %v319 = vadd.f32 0.0, %v318
        %v320 = vpop.f32.mrf.mxu0
        %v321 = vadd.f32 0.0, %v320
        %322 = vmatmul.bf16.gmra.mxu0 %v301
        %v323 = vpop.f32.mrf.mxu0
        %v324 = vadd.f32 0.0, %v323
        %v325 = vpop.f32.mrf.mxu0
        %v326 = vadd.f32 0.0, %v325
        %327 = vmatmul.bf16.gmra.mxu0 %v304
        %v328 = vpop.f32.mrf.mxu0
        %v329 = vadd.f32 0.0, %v328
        %v330 = vpop.f32.mrf.mxu0
        %v331 = vadd.f32 0.0, %v330
        %332 = vmatmul.bf16.gmra.mxu0 %v307
        %v333 = vpop.f32.mrf.mxu0
        %v334 = vadd.f32 0.0, %v333
        %v335 = vpop.f32.mrf.mxu0
        %v336 = vadd.f32 0.0, %v335
        %337 = vdwg.mxu0
        %v338 = vmax.f32 %v319, 0.0
        %v339 = vmax.f32 %v321, 0.0
        %v340 = vmax.f32 %v324, 0.0
        %v341 = vmax.f32 %v326, 0.0
        %v342 = vmax.f32 %v329, 0.0
        %v343 = vmax.f32 %v331, 0.0
        %v344 = vmax.f32 %v334, 0.0
        %v345 = vmax.f32 %v336, 0.0
        %v346 = vld [vmem:[%s2] sm:$0xf]
        %v347 = vld [vmem:[%s2 + $0x4] sm:$0xf]
        %v348 = vld [vmem:[%s2 + $0x8] sm:$0xf]
        %v349 = vld [vmem:[%s2 + $0xc] sm:$0xf]
        %v350 = vld [vmem:[%s2 + $0x10] sm:$0xf]
        %v351 = vld [vmem:[%s2 + $0x14] sm:$0xf]
        %v352 = vld [vmem:[%s2 + $0x18] sm:$0xf]
        %v353 = vld [vmem:[%s2 + $0x1c] sm:$0xf]
        %v354 = vpack.c.bf16 %v339, %v338
        %v355 = vpack.c.bf16 %v341, %v340
        %v356 = vpack.c.bf16 %v343, %v342
        %v357 = vpack.c.bf16 %v345, %v344
        %v366 = vunpack.c.l.b16 %v346
        %v367 = vunpack.c.l.b16 %v347
        %v368 = vunpack.c.l.b16 %v348
        %v369 = vunpack.c.l.b16 %v349
        %v370 = vunpack.c.l.b16 %v350
        %v371 = vunpack.c.l.b16 %v351
        %v372 = vunpack.c.l.b16 %v352
        %v373 = vunpack.c.l.b16 %v353
        %v374 = vpack.c.b16 %v367, %v366
        %v375 = vpack.c.b16 %v369, %v368
        %v376 = vpack.c.b16 %v371, %v370
        %v377 = vpack.c.b16 %v373, %v372
        %vm378 = vcmask 523264
        %v380 = vsel %vm378, %v374, 0
        %v383 = vsel %vm378, %v375, 0
        %v386 = vsel %vm378, %v376, 0
        %v389 = vsel %vm378, %v377, 0
        %391 = vmatpush.bf16.msra.mxu0 0
        %392 = vmatpush.bf16.msra.mxu0 0
        %393 = vmatpush.bf16.msra.mxu0 0
        %394 = vmatpush.bf16.msra.mxu0 0
        %395 = vmatpush.bf16.msra.mxu0 %v357
        %396 = vmatpush.bf16.msra.mxu0 %v356
        %397 = vmatpush.bf16.msra.mxu0 %v355
        %398 = vmatpush.bf16.msra.mxu0 %v354
        %399 = vmatmul.bf16.gmra.mxu0 %v380
        %v400 = vpop.f32.mrf.mxu0
        %v401 = vadd.f32 0.0, %v400
        %v402 = vpop.f32.mrf.mxu0
        %v403 = vadd.f32 0.0, %v402
        %404 = vmatmul.bf16.gmra.mxu0 %v383
        %v405 = vpop.f32.mrf.mxu0
        %v406 = vadd.f32 0.0, %v405
        %v407 = vpop.f32.mrf.mxu0
        %v408 = vadd.f32 0.0, %v407
        %409 = vmatmul.bf16.gmra.mxu0 %v386
        %v410 = vpop.f32.mrf.mxu0
        %v411 = vadd.f32 0.0, %v410
        %v412 = vpop.f32.mrf.mxu0
        %v413 = vadd.f32 0.0, %v412
        %414 = vmatmul.bf16.gmra.mxu0 %v389
        %v415 = vpop.f32.mrf.mxu0
        %v416 = vadd.f32 0.0, %v415
        %v417 = vpop.f32.mrf.mxu0
        %v418 = vadd.f32 0.0, %v417
        %419 = vdwg.mxu0
        %v420 = vmax.f32 %v401, 0.0
        %v421 = vmax.f32 %v403, 0.0
        %v422 = vmax.f32 %v406, 0.0
        %v423 = vmax.f32 %v408, 0.0
        %v424 = vmax.f32 %v411, 0.0
        %v425 = vmax.f32 %v413, 0.0
        %v426 = vmax.f32 %v416, 0.0
        %v427 = vmax.f32 %v418, 0.0
        %v428 = vld [vmem:[%s3] sm:$0xf]
        %v429 = vpack.c.bf16 %v421, %v420
        %v430 = vpack.c.bf16 %v423, %v422
        %v431 = vpack.c.bf16 %v425, %v424
        %v432 = vpack.c.bf16 %v427, %v426
        %v434 = vsel %vm378, %v428, 0
        %436 = vmatpush.bf16.msra.mxu0 0
        %437 = vmatpush.bf16.msra.mxu0 0
        %438 = vmatpush.bf16.msra.mxu0 0
        %439 = vmatpush.bf16.msra.mxu0 0
        %440 = vmatpush.bf16.msra.mxu0 %v432
        %441 = vmatpush.bf16.msra.mxu0 %v431
        %442 = vmatpush.bf16.msra.mxu0 %v430
        %443 = vmatpush.bf16.msra.mxu0 %v429
        %444 = vmatmul.bf16.gmra.mxu0 %v434
        %v445 = vpop.f32.mrf.mxu0
        %v446 = vadd.f32 0.0, %v445
        %v447 = vpop.f32.mrf.mxu0
        %448 = vdwg.mxu0
        %449 = vst [vmem:[%s250] sm:$0xff] %v446
        %s450 = sand.u32 %s115, 1
        %s451 = scalar_lea.sflag [#allocation4], %s450
        %s452 = sand.u32 %s115, 1
        %s453 = smul.addr %s452, 8
        %s454 = scalar_lea.vmem [#allocation3], %s453
        // Predicated region
        $region78: #{deep_double_sarsa_forward.1} parent=72 // pred_check
          %p455 = pneg %p125
        $region79: #{deep_double_sarsa_forward.1} parent=72 // pred_check_branch
          %457 = sbr.rel (%p455) target = $region81
        $region80: #{deep_double_sarsa_forward.1} parent=72 // pred_region
          %459 = vsyncadd %s451, 0
          %s460 = smul.addr %s18, 8
          %s461 = scalar_lea.hbm %s4, %s460
          %s463 = sshll.u32 %s454, 4
          %s464 = int_to_ptr.vmem [resolvable:$true] %s463
          %s465 = sshll.u32 %s461, 4
          %s466 = int_to_ptr.hbm [resolvable:$true] %s465
          %468 = dma.vmem_to_hbm [thread:$0]  %s464, 128, %s466, %s451
        $region81: #{deep_double_sarsa_forward.1} parent=72 // pred_fallthru
          _
      $region73: #{deep_double_sarsa_forward.1} parent=5 // pred_fallthru
        _
      %p469 = scmp.le.s32.totalorder 2, %s13
      // Predicated region
      $region82: #{deep_double_sarsa_forward.1} parent=5 // pred_check
        %p470 = pneg %p469
      $region83: #{deep_double_sarsa_forward.1} parent=5 // pred_check_branch
        %472 = sbr.rel (%p470) target = $region85
      $region84: #{deep_double_sarsa_forward.1} parent=5 // pred_region
        %s473 = ssub.s32 %s13, 2
        // Predicated region
        $region86: #{deep_double_sarsa_forward.1} parent=84 // pred_check
          %p474 = pneg %p131
        $region87: #{deep_double_sarsa_forward.1} parent=84 // pred_check_branch
          %476 = sbr.rel (%p474) target = $region89
        $region88: #{deep_double_sarsa_forward.1} parent=84 // pred_region
          %s477 = sand.u32 %s116, 1
          %s478 = scalar_lea.sflag [#allocation4], %s477
          %s479 = sand.u32 %s116, 1
          %s480 = smul.addr %s479, 8
          %s481 = scalar_lea.vmem [#allocation3], %s480
          %483 = dma.done %s478, 128
        $region89: #{deep_double_sarsa_forward.1} parent=84 // pred_fallthru
          _
      $region85: #{deep_double_sarsa_forward.1} parent=5 // pred_fallthru
        _
    $region6: #{deep_double_sarsa_forward.1} parent=1 // loop_footer
      %s17 = sadd.s32 1, %s13
    $region7: #{deep_double_sarsa_forward.1} parent=1 // loop_footer_branch
      %12 = sbr.rel target = $region3
    $region8: #{deep_double_sarsa_forward.1} parent=1 // loop_exit
      _
    %484 = vsyncpa [#allocation4], 1
    %s485 = scalar_lea.sflag [#allocation4], 1
    %486 = vsyncpa %s485, 1

</llo_original>
